<compile_context>
chip_gen: v7x
topology: tpu7x:2x2x1
jax: 0.10.0
libtpu: 0.0.40
codegen_flags: <defaults>
</compile_context>

<pallas_src>
import functools

import jax
import jax.numpy as jnp
from jax.experimental import pallas as pl
from jax.experimental.pallas import tpu as pltpu


_LANE = 128
_SUBLANE = 8
_MIB = 1024 * 1024
# Per-step working-set budget chosen to fit the smallest generation's default
# scoped VMEM (v7x: 32 MiB scoped / 64 MiB physical per TensorCore).
_VMEM_BUDGET = 24 * _MIB
_VMEM_CAP = 56 * _MIB


def _round_up(n, m):
    return -(-n // m) * m


def _apply_act(h, name):
    if name == "relu":
        return jnp.maximum(h, 0.0)
    if name == "tanh":
        return jnp.tanh(h)
    raise ValueError(f"unsupported nonlinearity: {name!r}")


# ------------------------------ Pallas kernel ------------------------------ #

def _mlp_kernel(*refs, n_layers, act, out_act):
    """refs = (x_ref, w0, b0, ..., w_{L-1}, b_{L-1}, o_ref).

    x_ref: (tm, K0p) f32; w_j: (K_jp, K_{j+1}p) bf16; b_j: (1, K_{j+1}p) f32.
    The whole layer chain runs on the current batch tile with every
    intermediate kept on-chip (no HBM round-trips between layers).  Matmuls use
    bf16 operands (native MXU dtype on all generations) with f32 accumulation;
    bias add and the nonlinearity stay in f32.
    """
    x_ref = refs[0]
    o_ref = refs[-1]
    wb = refs[1:-1]

    h = x_ref[...]                              # f32 (tm, K0p)
    for j in range(n_layers):
        w = wb[2 * j][...]                      # bf16 (K_jp, K_{j+1}p)
        b = wb[2 * j + 1][...]                  # f32  (1, K_{j+1}p)
        h = jnp.dot(h.astype(jnp.bfloat16), w,
                    preferred_element_type=jnp.float32) + b
        if j != n_layers - 1:
            h = _apply_act(h, act)
    if out_act is not None:
        h = _apply_act(h, out_act)
    o_ref[...] = h.astype(o_ref.dtype)


# ------------------------------ Host wrapper ------------------------------- #

class PallasDenseNet:
    """Fused Pallas forward for the PyTorch DeepONet `DenseNet` (normalize=False).

    params: list of (W, b) in PyTorch nn.Linear convention:
            W (out_f, in_f), b (out_f,).
    """

    def __init__(self, params, *, nonlinearity="tanh", out_nonlinearity=None,
                 tm_max=1024):
        assert len(params) >= 1
        self._act = nonlinearity
        self._out_act = out_nonlinearity
        self._n_layers = len(params)

        dims = [int(params[0][0].shape[1])] + [int(w.shape[0]) for (w, _) in params]
        self._dims = tuple(dims)
        self._dims_pad = tuple(_round_up(d, _LANE) for d in dims)

        # One-time padding / transposition (done eagerly, once).  Weights are
        # stored pre-cast to bf16 so the kernel feeds the MXU its native dtype.
        flat = []
        for j, (w, b) in enumerate(params):
            kp, np_ = self._dims_pad[j], self._dims_pad[j + 1]
            w = jnp.asarray(w, jnp.float32)
            b = jnp.asarray(b, jnp.float32)
            wp = (jnp.zeros((kp, np_), jnp.float32)
                  .at[:dims[j], :dims[j + 1]].set(w.T)
                  .astype(jnp.bfloat16))
            bp = jnp.zeros((1, np_), jnp.float32).at[0, :dims[j + 1]].set(b)
            flat += [wp, bp]
        self._flat_params = tuple(flat)

        # Resident weight/bias bytes (bf16 weights, f32 biases).
        self._wb_bytes = (2 * sum(self._dims_pad[j] * self._dims_pad[j + 1]
                                  for j in range(self._n_layers))
                          + 4 * sum(self._dims_pad[1:]))
        # Per-batch-row VMEM cost: double-buffered x/out tiles + a few live
        # f32 intermediates of the widest layer.
        self._row_bytes = 4 * (2 * (self._dims_pad[0] + self._dims_pad[-1])
                               + 4 * max(self._dims_pad))
        # Cap tm so one grid step fits the smallest VMEM budget.
        tm_cap = (_VMEM_BUDGET - 2 * self._wb_bytes) // self._row_bytes
        tm_cap = max(_SUBLANE, (tm_cap // _SUBLANE) * _SUBLANE)
        self._tm_max = max(_SUBLANE, min(int(tm_max), int(tm_cap)))

        self._jit_fwd = jax.jit(self._fwd)

    # Batch tiling: pad B to a multiple of 8; large batches get an even number
    # of >=2 "parallel" grid steps (both v7x TensorCores busy) with tm chosen
    # to exactly divide the padded batch.
    def _tiling(self, B):
        Mp = _round_up(max(B, 1), _SUBLANE)
        if Mp <= 256:
            return Mp, Mp, 1
        steps = 2 * pl.cdiv(Mp, 2 * self._tm_max)
        tm = _round_up(pl.cdiv(Mp, steps), _SUBLANE)
        return tm * steps, tm, steps

    def _fwd(self, x, *flat_params):
        B, d_in = x.shape
        assert d_in == self._dims[0], (d_in, self._dims[0])
        Mp, tm, steps = self._tiling(B)
        k0p, klp = self._dims_pad[0], self._dims_pad[-1]

        xp = jnp.zeros((Mp, k0p), jnp.float32).at[:B, :d_in].set(
            x.astype(jnp.float32))

        in_specs = [pl.BlockSpec((tm, k0p), lambda i: (i, 0))]
        for j in range(self._n_layers):
            kp, np_ = self._dims_pad[j], self._dims_pad[j + 1]
            # Constant block index across the grid -> weights/biases stay
            # resident in VMEM for the whole call (they are tiny).
            in_specs += [pl.BlockSpec((kp, np_), lambda i: (0, 0)),
                         pl.BlockSpec((1, np_), lambda i: (0, 0))]

        vmem_limit = int(min(
            _VMEM_CAP,
            max(32 * _MIB, 2 * (self._wb_bytes + tm * self._row_bytes))))

        out = pl.pallas_call(
            functools.partial(_mlp_kernel, n_layers=self._n_layers,
                              act=self._act, out_act=self._out_act),
            out_shape=jax.ShapeDtypeStruct((Mp, klp), jnp.float32),
            grid=(steps,),
            in_specs=in_specs,
            out_specs=pl.BlockSpec((tm, klp), lambda i: (i, 0)),
            compiler_params=pltpu.CompilerParams(
                dimension_semantics=("parallel",),
                vmem_limit_bytes=vmem_limit),
        )(xp, *flat_params)

        return out[:B, :self._dims[-1]]

    def __call__(self, x):
        return self._jit_fwd(x, *self._flat_params)


# ------------------------- Pure-JAX reference model ------------------------ #

def reference_forward(x, params, *, nonlinearity="tanh", out_nonlinearity=None):
    """Mirrors the PyTorch DenseNet.forward exactly (normalize=False), in f32."""
    h = jnp.asarray(x, jnp.float32)
    n = len(params)
    for j, (w, b) in enumerate(params):
        h = h @ jnp.asarray(w, jnp.float32).T + jnp.asarray(b, jnp.float32)
        if j != n - 1:
            h = _apply_act(h, nonlinearity)
    if out_nonlinearity is not None:
        h = _apply_act(h, out_nonlinearity)
    return h


if __name__ == "__main__":
    # DeepONet-style DenseNet: layers=[40, 128, 128, 64], nonlinearity=nn.Tanh.
    layers = [40, 128, 128, 64]
    B = 64

    key = jax.random.PRNGKey(0)
    keys = jax.random.split(key, 2 * (len(layers) - 1) + 1)

    x = jax.random.normal(keys[0], (B, layers[0]), jnp.float32)

    params = []
    for j in range(len(layers) - 1):
        fan_in = layers[j]
        w = (1.0 / jnp.sqrt(jnp.float32(fan_in))) * jax.random.normal(
            keys[1 + 2 * j], (layers[j + 1], layers[j]), jnp.float32)
        b = 0.01 * jax.random.normal(keys[2 + 2 * j], (layers[j + 1],), jnp.float32)
        params.append((w, b))

    model = PallasDenseNet(params, nonlinearity="tanh")
    out = jax.block_until_ready(model(x))
    ref = jax.block_until_ready(
        reference_forward(x, params, nonlinearity="tanh"))

    assert out.shape == (B, layers[-1]), out.shape
    # bf16 MXU operands (f32 accumulation) -> looser tolerance than pure f32.
    if not jnp.allclose(out, ref, rtol=5e-2, atol=5e-2):
        raise AssertionError(
            f"mismatch vs reference: max abs diff = "
            f"{float(jnp.max(jnp.abs(out - ref)))}")
    print("KERNEL_OK")
</pallas_src>

<mosaic_0001>
module attributes {stable_mosaic.version = 11 : i64} {
  func.func @_mlp_kernel(%arg0: i32, %arg1: memref<64x128xf32, #tpu.memory_space<vmem>>, %arg2: memref<128x128xbf16, #tpu.memory_space<vmem>>, %arg3: memref<1x128xf32, #tpu.memory_space<vmem>>, %arg4: memref<128x128xbf16, #tpu.memory_space<vmem>>, %arg5: memref<1x128xf32, #tpu.memory_space<vmem>>, %arg6: memref<128x128xbf16, #tpu.memory_space<vmem>>, %arg7: memref<1x128xf32, #tpu.memory_space<vmem>>, %arg8: memref<64x128xf32, #tpu.memory_space<vmem>>) attributes {dimension_semantics = [#tpu.dimension_semantics<parallel>], iteration_bounds = array<i64: 1>, scalar_prefetch = 0 : i64, scratch_operands = 0 : i64, tpu.core_type = #tpu.core_type<tc>, window_params = [{transform_indices = @transform_0, window_bounds = array<i64: 64, 128>}, {pipeline_mode = #tpu.pipeline_mode<synchronous>, transform_indices = @transform_1, window_bounds = array<i64: 128, 128>}, {pipeline_mode = #tpu.pipeline_mode<synchronous>, transform_indices = @transform_2, window_bounds = array<i64: 1, 128>}, {pipeline_mode = #tpu.pipeline_mode<synchronous>, transform_indices = @transform_3, window_bounds = array<i64: 128, 128>}, {pipeline_mode = #tpu.pipeline_mode<synchronous>, transform_indices = @transform_4, window_bounds = array<i64: 1, 128>}, {pipeline_mode = #tpu.pipeline_mode<synchronous>, transform_indices = @transform_5, window_bounds = array<i64: 128, 128>}, {pipeline_mode = #tpu.pipeline_mode<synchronous>, transform_indices = @transform_6, window_bounds = array<i64: 1, 128>}, {transform_indices = @transform_7, window_bounds = array<i64: 64, 128>}]} {
    %c0 = arith.constant 0 : index
    %c0_0 = arith.constant 0 : index
    %0 = vector.load %arg1[%c0, %c0_0] : memref<64x128xf32, #tpu.memory_space<vmem>>, vector<64x128xf32>
    %c0_1 = arith.constant 0 : index
    %c0_2 = arith.constant 0 : index
    %1 = vector.load %arg2[%c0_1, %c0_2] : memref<128x128xbf16, #tpu.memory_space<vmem>>, vector<128x128xbf16>
    %c0_3 = arith.constant 0 : index
    %c0_4 = arith.constant 0 : index
    %2 = vector.load %arg3[%c0_3, %c0_4] : memref<1x128xf32, #tpu.memory_space<vmem>>, vector<1x128xf32>
    %3 = arith.truncf %0 : vector<64x128xf32> to vector<64x128xbf16>
    %cst = arith.constant dense<0.000000e+00> : vector<64x128xf32>
    %4 = tpu.matmul %3, %1, %cst {dimension_numbers = #tpu.dot_dimension_numbers<[1], [0], [0], [1], [0, 0, 1, 1], [], []>} : vector<64x128xbf16>, vector<128x128xbf16>, vector<64x128xf32> -> vector<64x128xf32>
    %5 = vector.broadcast %2 : vector<1x128xf32> to vector<64x128xf32>
    %6 = arith.addf %4, %5 : vector<64x128xf32>
    %7 = math.tanh %6 : vector<64x128xf32>
    %c0_5 = arith.constant 0 : index
    %c0_6 = arith.constant 0 : index
    %8 = vector.load %arg4[%c0_5, %c0_6] : memref<128x128xbf16, #tpu.memory_space<vmem>>, vector<128x128xbf16>
    %c0_7 = arith.constant 0 : index
    %c0_8 = arith.constant 0 : index
    %9 = vector.load %arg5[%c0_7, %c0_8] : memref<1x128xf32, #tpu.memory_space<vmem>>, vector<1x128xf32>
    %10 = arith.truncf %7 : vector<64x128xf32> to vector<64x128xbf16>
    %cst_9 = arith.constant dense<0.000000e+00> : vector<64x128xf32>
    %11 = tpu.matmul %10, %8, %cst_9 {dimension_numbers = #tpu.dot_dimension_numbers<[1], [0], [0], [1], [0, 0, 1, 1], [], []>} : vector<64x128xbf16>, vector<128x128xbf16>, vector<64x128xf32> -> vector<64x128xf32>
    %12 = vector.broadcast %9 : vector<1x128xf32> to vector<64x128xf32>
    %13 = arith.addf %11, %12 : vector<64x128xf32>
    %14 = math.tanh %13 : vector<64x128xf32>
    %c0_10 = arith.constant 0 : index
    %c0_11 = arith.constant 0 : index
    %15 = vector.load %arg6[%c0_10, %c0_11] : memref<128x128xbf16, #tpu.memory_space<vmem>>, vector<128x128xbf16>
    %c0_12 = arith.constant 0 : index
    %c0_13 = arith.constant 0 : index
    %16 = vector.load %arg7[%c0_12, %c0_13] : memref<1x128xf32, #tpu.memory_space<vmem>>, vector<1x128xf32>
    %17 = arith.truncf %14 : vector<64x128xf32> to vector<64x128xbf16>
    %cst_14 = arith.constant dense<0.000000e+00> : vector<64x128xf32>
    %18 = tpu.matmul %17, %15, %cst_14 {dimension_numbers = #tpu.dot_dimension_numbers<[1], [0], [0], [1], [0, 0, 1, 1], [], []>} : vector<64x128xbf16>, vector<128x128xbf16>, vector<64x128xf32> -> vector<64x128xf32>
    %19 = vector.broadcast %16 : vector<1x128xf32> to vector<64x128xf32>
    %20 = arith.addf %18, %19 : vector<64x128xf32>
    %c0_15 = arith.constant 0 : index
    %c0_16 = arith.constant 0 : index
    %21 = vector.load %arg8[%c0_15, %c0_16] : memref<64x128xf32, #tpu.memory_space<vmem>>, vector<64x128xf32>
    tpu.vector_store %arg8[%c0_15, %c0_16], %20 {strides = array<i32>} : memref<64x128xf32, #tpu.memory_space<vmem>>, vector<64x128xf32>,
    return
  }
  func.func @transform_0(%arg0: i32) -> (i32, i32) {
    %c0_i32 = arith.constant 0 : i32
    %c0_i32_0 = arith.constant 0 : i32
    return %arg0, %c0_i32 : i32, i32
  }
  func.func @transform_1(%arg0: i32) -> (i32, i32) {
    %c0_i32 = arith.constant 0 : i32
    %c0_i32_0 = arith.constant 0 : i32
    %c0_i32_1 = arith.constant 0 : i32
    return %c0_i32, %c0_i32_0 : i32, i32
  }
  func.func @transform_2(%arg0: i32) -> (i32, i32) {
    %c0_i32 = arith.constant 0 : i32
    %c0_i32_0 = arith.constant 0 : i32
    %c0_i32_1 = arith.constant 0 : i32
    return %c0_i32, %c0_i32_0 : i32, i32
  }
  func.func @transform_3(%arg0: i32) -> (i32, i32) {
    %c0_i32 = arith.constant 0 : i32
    %c0_i32_0 = arith.constant 0 : i32
    %c0_i32_1 = arith.constant 0 : i32
    return %c0_i32, %c0_i32_0 : i32, i32
  }
  func.func @transform_4(%arg0: i32) -> (i32, i32) {
    %c0_i32 = arith.constant 0 : i32
    %c0_i32_0 = arith.constant 0 : i32
    %c0_i32_1 = arith.constant 0 : i32
    return %c0_i32, %c0_i32_0 : i32, i32
  }
  func.func @transform_5(%arg0: i32) -> (i32, i32) {
    %c0_i32 = arith.constant 0 : i32
    %c0_i32_0 = arith.constant 0 : i32
    %c0_i32_1 = arith.constant 0 : i32
    return %c0_i32, %c0_i32_0 : i32, i32
  }
  func.func @transform_6(%arg0: i32) -> (i32, i32) {
    %c0_i32 = arith.constant 0 : i32
    %c0_i32_0 = arith.constant 0 : i32
    %c0_i32_1 = arith.constant 0 : i32
    return %c0_i32, %c0_i32_0 : i32, i32
  }
  func.func @transform_7(%arg0: i32) -> (i32, i32) {
    %c0_i32 = arith.constant 0 : i32
    %c0_i32_0 = arith.constant 0 : i32
    return %arg0, %c0_i32 : i32, i32
  }
}

</mosaic_0001>

<llo_original>
// kernel: _fwd.1
$region0: #{_fwd.1}
  #allocation0 [shape = 'u32[]', space=smem, size = 0x4, offset = 0x4, fixed_abs, tag = 'smem constant byte address 0x4 - core index']
  #allocation1 [shape = 'u32[144,128]{1,0:T(1,128)}', space=vmem, size = 0x12000, scoped, tag = 'internal scratch']
  %s0 = inlined_call_operand.vmem [shape: f32[64,128], index: 0, kind: input, shape index: {}]
  %s1 = inlined_call_operand.vmem [shape: bf16[128,128], index: 1, kind: input, shape index: {}]
  %s2 = inlined_call_operand.vmem [shape: f32[1,128], index: 2, kind: input, shape index: {}]
  %s3 = inlined_call_operand.vmem [shape: bf16[128,128], index: 3, kind: input, shape index: {}]
  %s4 = inlined_call_operand.vmem [shape: f32[1,128], index: 4, kind: input, shape index: {}]
  %s5 = inlined_call_operand.vmem [shape: bf16[128,128], index: 5, kind: input, shape index: {}]
  %s6 = inlined_call_operand.vmem [shape: f32[1,128], index: 6, kind: input, shape index: {}]
  %s7 = inlined_call_operand.hbm [shape: f32[64,128], index: 7, kind: output, shape index: {}]
  %s8 = sld [smem:[#allocation0]]
  $region38: #{_fwd.1} parent=0
    _
  %s10 = ssub.s32 1, %s8
  %s11 = scalar_select 0, %s10, %s8
  $region1: #{_fwd.1} parent=0
    #allocation2 [shape = 'u8[32768]{0}', space=vmem, size = 0x8000, scoped, tag = 'output window, operand 0, single buffered']
    #allocation3 [shape = 's32[1]{0}', space=sflag, size = 0x4, scoped, tag = 'scoped memory for _fwd.1']
    %12 = vsyncpa [#allocation3], 0
    // Predicated region
    $region2: #{_fwd.1} parent=1 // pred_check
      _
    $region3: #{_fwd.1} parent=1 // pred_check_branch
      %14 = sbr.rel (0) target = $region5
    $region4: #{_fwd.1} parent=1 // pred_region
      _
    $region5: #{_fwd.1} parent=1 // pred_fallthru
      _
    // Predicated region
    $region6: #{_fwd.1} parent=1 // pred_check
      _
    $region7: #{_fwd.1} parent=1 // pred_check_branch
      %16 = sbr.rel (0) target = $region9
    $region8: #{_fwd.1} parent=1 // pred_region
      _
    $region9: #{_fwd.1} parent=1 // pred_fallthru
      _
    // Predicated region
    $region10: #{_fwd.1} parent=1 // pred_check
      _
    $region11: #{_fwd.1} parent=1 // pred_check_branch
      %18 = sbr.rel (0) target = $region13
    $region12: #{_fwd.1} parent=1 // pred_region
      _
    $region13: #{_fwd.1} parent=1 // pred_fallthru
      _
    // Predicated region
    $region14: #{_fwd.1} parent=1 // pred_check
      _
    $region15: #{_fwd.1} parent=1 // pred_check_branch
      %20 = sbr.rel (0) target = $region17
    $region16: #{_fwd.1} parent=1 // pred_region
      _
    $region17: #{_fwd.1} parent=1 // pred_fallthru
      _
    // Predicated region
    $region18: #{_fwd.1} parent=1 // pred_check
      _
    $region19: #{_fwd.1} parent=1 // pred_check_branch
      %22 = sbr.rel (0) target = $region21
    $region20: #{_fwd.1} parent=1 // pred_region
      _
    $region21: #{_fwd.1} parent=1 // pred_fallthru
      _
    // Predicated region
    $region22: #{_fwd.1} parent=1 // pred_check
      _
    $region23: #{_fwd.1} parent=1 // pred_check_branch
      %24 = sbr.rel (0) target = $region25
    $region24: #{_fwd.1} parent=1 // pred_region
      _
    $region25: #{_fwd.1} parent=1 // pred_fallthru
      _
    // Predicated region
    $region26: #{_fwd.1} parent=1 // pred_check
      _
    $region27: #{_fwd.1} parent=1 // pred_check_branch
      %26 = sbr.rel (0) target = $region29
    $region28: #{_fwd.1} parent=1 // pred_region
      _
    $region29: #{_fwd.1} parent=1 // pred_fallthru
      _
    %v28 = vld [vmem:[%s0] sm:$0xff]
    %v29 = vld [vmem:[%s0 + $0x8] sm:$0xff]
    %v30 = vld [vmem:[%s0 + $0x10] sm:$0xff]
    %v31 = vld [vmem:[%s0 + $0x18] sm:$0xff]
    %v32 = vld [vmem:[%s0 + $0x20] sm:$0xff]
    %v33 = vld [vmem:[%s0 + $0x28] sm:$0xff]
    %v34 = vld [vmem:[%s0 + $0x30] sm:$0xff]
    %v35 = vld [vmem:[%s0 + $0x38] sm:$0xff]
    %v36 = vld [vmem:[%s1] sm:$0xf]
    %v37 = vld [vmem:[%s1 + $0x4] sm:$0xf]
    %v38 = vld [vmem:[%s1 + $0x8] sm:$0xf]
    %v39 = vld [vmem:[%s1 + $0xc] sm:$0xf]
    %v40 = vld [vmem:[%s1 + $0x10] sm:$0xf]
    %v41 = vld [vmem:[%s1 + $0x14] sm:$0xf]
    %v42 = vld [vmem:[%s1 + $0x18] sm:$0xf]
    %v43 = vld [vmem:[%s1 + $0x1c] sm:$0xf]
    %v44 = vld [vmem:[%s1 + $0x20] sm:$0xf]
    %v45 = vld [vmem:[%s1 + $0x24] sm:$0xf]
    %v46 = vld [vmem:[%s1 + $0x28] sm:$0xf]
    %v47 = vld [vmem:[%s1 + $0x2c] sm:$0xf]
    %v48 = vld [vmem:[%s1 + $0x30] sm:$0xf]
    %v49 = vld [vmem:[%s1 + $0x34] sm:$0xf]
    %v50 = vld [vmem:[%s1 + $0x38] sm:$0xf]
    %v51 = vld [vmem:[%s1 + $0x3c] sm:$0xf]
    %v52 = vld [vmem:[%s2] sm:$0x1]
    %v53 = vpack.c.bf16 %v29, %v28
    %v54 = vpack.c.bf16 %v31, %v30
    %v55 = vpack.c.bf16 %v33, %v32
    %v56 = vpack.c.bf16 %v35, %v34
    %v58 = vlaneseq
    %v59 = vshrl.u32 %v58, 7
    %v60 = vsub.s32 0, %v59
    %v61 = vrot.slane %v52, %v60
    %v79 = vunpack.c.l.b16 %v36
    %v80 = vunpack.c.l.b16 %v37
    %v81 = vunpack.c.l.b16 %v38
    %v82 = vunpack.c.l.b16 %v39
    %v83 = vunpack.c.l.b16 %v40
    %v84 = vunpack.c.l.b16 %v41
    %v85 = vunpack.c.l.b16 %v42
    %v86 = vunpack.c.l.b16 %v43
    %v87 = vunpack.c.l.b16 %v44
    %v88 = vunpack.c.l.b16 %v45
    %v89 = vunpack.c.l.b16 %v46
    %v90 = vunpack.c.l.b16 %v47
    %v91 = vunpack.c.l.b16 %v48
    %v92 = vunpack.c.l.b16 %v49
    %v93 = vunpack.c.l.b16 %v50
    %v94 = vunpack.c.l.b16 %v51
    %v95 = vpack.c.b16 %v80, %v79
    %v96 = vpack.c.b16 %v82, %v81
    %v97 = vpack.c.b16 %v84, %v83
    %v98 = vpack.c.b16 %v86, %v85
    %v99 = vpack.c.b16 %v88, %v87
    %v100 = vpack.c.b16 %v90, %v89
    %v101 = vpack.c.b16 %v92, %v91
    %v102 = vpack.c.b16 %v94, %v93
    %111 = vmatprep.subr.bf16.mxu0 0
    %112 = vmatpush1.bf16.msra.mxu0 %v95
    %113 = vmatprep.subr.bf16.mxu0 0
    %114 = vmatpush1.bf16.msra.mxu0 %v96
    %115 = vmatprep.subr.bf16.mxu0 0
    %116 = vmatpush1.bf16.msra.mxu0 %v97
    %117 = vmatprep.subr.bf16.mxu0 0
    %118 = vmatpush1.bf16.msra.mxu0 %v98
    %119 = vmatprep.subr.bf16.mxu0 0
    %120 = vmatpush1.bf16.msra.mxu0 %v99
    %121 = vmatprep.subr.bf16.mxu0 0
    %122 = vmatpush1.bf16.msra.mxu0 %v100
    %123 = vmatprep.subr.bf16.mxu0 0
    %124 = vmatpush1.bf16.msra.mxu0 %v101
    %125 = vmatprep.subr.bf16.mxu0 0
    %126 = vmatpush1.bf16.msra.mxu0 %v102
    %127 = vmatprep.subr.bf16.mxu0 0
    %128 = vmatpush1.bf16.msra.mxu0 0
    %129 = vmatprep.subr.bf16.mxu0 0
    %130 = vmatpush1.bf16.msra.mxu0 0
    %131 = vmatprep.subr.bf16.mxu0 0
    %132 = vmatpush1.bf16.msra.mxu0 0
    %133 = vmatprep.subr.bf16.mxu0 0
    %134 = vmatpush1.bf16.msra.mxu0 0
    %135 = vmatprep.subr.bf16.mxu0 0
    %136 = vmatpush1.bf16.msra.mxu0 0
    %137 = vmatprep.subr.bf16.mxu0 0
    %138 = vmatpush1.bf16.msra.mxu0 0
    %139 = vmatprep.subr.bf16.mxu0 0
    %140 = vmatpush1.bf16.msra.mxu0 0
    %141 = vmatprep.subr.bf16.mxu0 0
    %142 = vmatpush1.bf16.msra.mxu0 0
    %143 = vmatprep.mubr.bf16.mxu0 0
    %144 = vmatmul.mubr.bf16.gmra.mrb[0].mxu0 %v53
    %v145 = vpop.f32.mrb[0].mxu0
    %v146 = vadd.f32 %v61, %v145
    %v147 = vpop.f32.mrb[0].mxu0
    %v148 = vpop.f32.mrb[0].mxu0
    %v149 = vadd.f32 %v61, %v148
    %v150 = vpop.f32.mrb[0].mxu0
    %151 = vmatprep.mubr.bf16.mxu0 0
    %152 = vmatmul.mubr.bf16.gmra.mrb[0].mxu0 %v54
    %v153 = vpop.f32.mrb[0].mxu0
    %v154 = vadd.f32 %v61, %v153
    %v155 = vpop.f32.mrb[0].mxu0
    %v156 = vpop.f32.mrb[0].mxu0
    %v157 = vadd.f32 %v61, %v156
    %v158 = vpop.f32.mrb[0].mxu0
    %159 = vmatprep.mubr.bf16.mxu0 0
    %160 = vmatmul.mubr.bf16.gmra.mrb[0].mxu0 %v55
    %v161 = vpop.f32.mrb[0].mxu0
    %v162 = vadd.f32 %v61, %v161
    %v163 = vpop.f32.mrb[0].mxu0
    %v164 = vpop.f32.mrb[0].mxu0
    %v165 = vadd.f32 %v61, %v164
    %v166 = vpop.f32.mrb[0].mxu0
    %167 = vmatprep.mubr.bf16.mxu0 0
    %168 = vmatmul.mubr.bf16.gmra.mrb[0].mxu0 %v56
    %v169 = vpop.f32.mrb[0].mxu0
    %v170 = vadd.f32 %v61, %v169
    %v171 = vpop.f32.mrb[0].mxu0
    %v172 = vpop.f32.mrb[0].mxu0
    %v173 = vadd.f32 %v61, %v172
    %v174 = vpop.f32.mrb[0].mxu0
    %175 = vdwg.mxu0
    %v176 = vtanh.pop %v146
    %v177 = vtanh.pop %v149
    %v178 = vtanh.pop %v154
    %v179 = vtanh.pop %v157
    %v180 = vtanh.pop %v162
    %v181 = vtanh.pop %v165
    %v182 = vtanh.pop %v170
    %v183 = vtanh.pop %v173
    %v184 = vld [vmem:[%s3] sm:$0xf]
    %v185 = vld [vmem:[%s3 + $0x4] sm:$0xf]
    %v186 = vld [vmem:[%s3 + $0x8] sm:$0xf]
    %v187 = vld [vmem:[%s3 + $0xc] sm:$0xf]
    %v188 = vld [vmem:[%s3 + $0x10] sm:$0xf]
    %v189 = vld [vmem:[%s3 + $0x14] sm:$0xf]
    %v190 = vld [vmem:[%s3 + $0x18] sm:$0xf]
    %v191 = vld [vmem:[%s3 + $0x1c] sm:$0xf]
    %v192 = vld [vmem:[%s3 + $0x20] sm:$0xf]
    %v193 = vld [vmem:[%s3 + $0x24] sm:$0xf]
    %v194 = vld [vmem:[%s3 + $0x28] sm:$0xf]
    %v195 = vld [vmem:[%s3 + $0x2c] sm:$0xf]
    %v196 = vld [vmem:[%s3 + $0x30] sm:$0xf]
    %v197 = vld [vmem:[%s3 + $0x34] sm:$0xf]
    %v198 = vld [vmem:[%s3 + $0x38] sm:$0xf]
    %v199 = vld [vmem:[%s3 + $0x3c] sm:$0xf]
    %v200 = vld [vmem:[%s4] sm:$0x1]
    %v201 = vpack.c.bf16 %v177, %v176
    %v202 = vpack.c.bf16 %v179, %v178
    %v203 = vpack.c.bf16 %v181, %v180
    %v204 = vpack.c.bf16 %v183, %v182
    %v206 = vlaneseq
    %v207 = vshrl.u32 %v206, 7
    %v208 = vsub.s32 0, %v207
    %v209 = vrot.slane %v200, %v208
    %v227 = vunpack.c.l.b16 %v184
    %v228 = vunpack.c.l.b16 %v185
    %v229 = vunpack.c.l.b16 %v186
    %v230 = vunpack.c.l.b16 %v187
    %v231 = vunpack.c.l.b16 %v188
    %v232 = vunpack.c.l.b16 %v189
    %v233 = vunpack.c.l.b16 %v190
    %v234 = vunpack.c.l.b16 %v191
    %v235 = vunpack.c.l.b16 %v192
    %v236 = vunpack.c.l.b16 %v193
    %v237 = vunpack.c.l.b16 %v194
    %v238 = vunpack.c.l.b16 %v195
    %v239 = vunpack.c.l.b16 %v196
    %v240 = vunpack.c.l.b16 %v197
    %v241 = vunpack.c.l.b16 %v198
    %v242 = vunpack.c.l.b16 %v199
    %v243 = vpack.c.b16 %v228, %v227
    %v244 = vpack.c.b16 %v230, %v229
    %v245 = vpack.c.b16 %v232, %v231
    %v246 = vpack.c.b16 %v234, %v233
    %v247 = vpack.c.b16 %v236, %v235
    %v248 = vpack.c.b16 %v238, %v237
    %v249 = vpack.c.b16 %v240, %v239
    %v250 = vpack.c.b16 %v242, %v241
    %259 = vmatprep.subr.bf16.mxu0 0
    %260 = vmatpush1.bf16.msra.mxu0 %v243
    %261 = vmatprep.subr.bf16.mxu0 0
    %262 = vmatpush1.bf16.msra.mxu0 %v244
    %263 = vmatprep.subr.bf16.mxu0 0
    %264 = vmatpush1.bf16.msra.mxu0 %v245
    %265 = vmatprep.subr.bf16.mxu0 0
    %266 = vmatpush1.bf16.msra.mxu0 %v246
    %267 = vmatprep.subr.bf16.mxu0 0
    %268 = vmatpush1.bf16.msra.mxu0 %v247
    %269 = vmatprep.subr.bf16.mxu0 0
    %270 = vmatpush1.bf16.msra.mxu0 %v248
    %271 = vmatprep.subr.bf16.mxu0 0
    %272 = vmatpush1.bf16.msra.mxu0 %v249
    %273 = vmatprep.subr.bf16.mxu0 0
    %274 = vmatpush1.bf16.msra.mxu0 %v250
    %275 = vmatprep.subr.bf16.mxu0 0
    %276 = vmatpush1.bf16.msra.mxu0 0
    %277 = vmatprep.subr.bf16.mxu0 0
    %278 = vmatpush1.bf16.msra.mxu0 0
    %279 = vmatprep.subr.bf16.mxu0 0
    %280 = vmatpush1.bf16.msra.mxu0 0
    %281 = vmatprep.subr.bf16.mxu0 0
    %282 = vmatpush1.bf16.msra.mxu0 0
    %283 = vmatprep.subr.bf16.mxu0 0
    %284 = vmatpush1.bf16.msra.mxu0 0
    %285 = vmatprep.subr.bf16.mxu0 0
    %286 = vmatpush1.bf16.msra.mxu0 0
    %287 = vmatprep.subr.bf16.mxu0 0
    %288 = vmatpush1.bf16.msra.mxu0 0
    %289 = vmatprep.subr.bf16.mxu0 0
    %290 = vmatpush1.bf16.msra.mxu0 0
    %291 = vmatprep.mubr.bf16.mxu0 0
    %292 = vmatmul.mubr.bf16.gmra.mrb[0].mxu0 %v201
    %v293 = vpop.f32.mrb[0].mxu0
    %v294 = vadd.f32 %v209, %v293
    %v295 = vpop.f32.mrb[0].mxu0
    %v296 = vpop.f32.mrb[0].mxu0
    %v297 = vadd.f32 %v209, %v296
    %v298 = vpop.f32.mrb[0].mxu0
    %299 = vmatprep.mubr.bf16.mxu0 0
    %300 = vmatmul.mubr.bf16.gmra.mrb[0].mxu0 %v202
    %v301 = vpop.f32.mrb[0].mxu0
    %v302 = vadd.f32 %v209, %v301
    %v303 = vpop.f32.mrb[0].mxu0
    %v304 = vpop.f32.mrb[0].mxu0
    %v305 = vadd.f32 %v209, %v304
    %v306 = vpop.f32.mrb[0].mxu0
    %307 = vmatprep.mubr.bf16.mxu0 0
    %308 = vmatmul.mubr.bf16.gmra.mrb[0].mxu0 %v203
    %v309 = vpop.f32.mrb[0].mxu0
    %v310 = vadd.f32 %v209, %v309
    %v311 = vpop.f32.mrb[0].mxu0
    %v312 = vpop.f32.mrb[0].mxu0
    %v313 = vadd.f32 %v209, %v312
    %v314 = vpop.f32.mrb[0].mxu0
    %315 = vmatprep.mubr.bf16.mxu0 0
    %316 = vmatmul.mubr.bf16.gmra.mrb[0].mxu0 %v204
    %v317 = vpop.f32.mrb[0].mxu0
    %v318 = vadd.f32 %v209, %v317
    %v319 = vpop.f32.mrb[0].mxu0
    %v320 = vpop.f32.mrb[0].mxu0
    %v321 = vadd.f32 %v209, %v320
    %v322 = vpop.f32.mrb[0].mxu0
    %323 = vdwg.mxu0
    %v324 = vtanh.pop %v294
    %v325 = vtanh.pop %v297
    %v326 = vtanh.pop %v302
    %v327 = vtanh.pop %v305
    %v328 = vtanh.pop %v310
    %v329 = vtanh.pop %v313
    %v330 = vtanh.pop %v318
    %v331 = vtanh.pop %v321
    %v332 = vld [vmem:[%s5] sm:$0xf]
    %v333 = vld [vmem:[%s5 + $0x4] sm:$0xf]
    %v334 = vld [vmem:[%s5 + $0x8] sm:$0xf]
    %v335 = vld [vmem:[%s5 + $0xc] sm:$0xf]
    %v336 = vld [vmem:[%s5 + $0x10] sm:$0xf]
    %v337 = vld [vmem:[%s5 + $0x14] sm:$0xf]
    %v338 = vld [vmem:[%s5 + $0x18] sm:$0xf]
    %v339 = vld [vmem:[%s5 + $0x1c] sm:$0xf]
    %v340 = vld [vmem:[%s5 + $0x20] sm:$0xf]
    %v341 = vld [vmem:[%s5 + $0x24] sm:$0xf]
    %v342 = vld [vmem:[%s5 + $0x28] sm:$0xf]
    %v343 = vld [vmem:[%s5 + $0x2c] sm:$0xf]
    %v344 = vld [vmem:[%s5 + $0x30] sm:$0xf]
    %v345 = vld [vmem:[%s5 + $0x34] sm:$0xf]
    %v346 = vld [vmem:[%s5 + $0x38] sm:$0xf]
    %v347 = vld [vmem:[%s5 + $0x3c] sm:$0xf]
    %v348 = vld [vmem:[%s6] sm:$0x1]
    %v349 = vpack.c.bf16 %v325, %v324
    %v350 = vpack.c.bf16 %v327, %v326
    %v351 = vpack.c.bf16 %v329, %v328
    %v352 = vpack.c.bf16 %v331, %v330
    %v354 = vlaneseq
    %v355 = vshrl.u32 %v354, 7
    %v356 = vsub.s32 0, %v355
    %v357 = vrot.slane %v348, %v356
    %v375 = vunpack.c.l.b16 %v332
    %v376 = vunpack.c.l.b16 %v333
    %v377 = vunpack.c.l.b16 %v334
    %v378 = vunpack.c.l.b16 %v335
    %v379 = vunpack.c.l.b16 %v336
    %v380 = vunpack.c.l.b16 %v337
    %v381 = vunpack.c.l.b16 %v338
    %v382 = vunpack.c.l.b16 %v339
    %v383 = vunpack.c.l.b16 %v340
    %v384 = vunpack.c.l.b16 %v341
    %v385 = vunpack.c.l.b16 %v342
    %v386 = vunpack.c.l.b16 %v343
    %v387 = vunpack.c.l.b16 %v344
    %v388 = vunpack.c.l.b16 %v345
    %v389 = vunpack.c.l.b16 %v346
    %v390 = vunpack.c.l.b16 %v347
    %v391 = vpack.c.b16 %v376, %v375
    %v392 = vpack.c.b16 %v378, %v377
    %v393 = vpack.c.b16 %v380, %v379
    %v394 = vpack.c.b16 %v382, %v381
    %v395 = vpack.c.b16 %v384, %v383
    %v396 = vpack.c.b16 %v386, %v385
    %v397 = vpack.c.b16 %v388, %v387
    %v398 = vpack.c.b16 %v390, %v389
    %407 = vmatprep.subr.bf16.mxu0 0
    %408 = vmatpush1.bf16.msra.mxu0 %v391
    %409 = vmatprep.subr.bf16.mxu0 0
    %410 = vmatpush1.bf16.msra.mxu0 %v392
    %411 = vmatprep.subr.bf16.mxu0 0
    %412 = vmatpush1.bf16.msra.mxu0 %v393
    %413 = vmatprep.subr.bf16.mxu0 0
    %414 = vmatpush1.bf16.msra.mxu0 %v394
    %415 = vmatprep.subr.bf16.mxu0 0
    %416 = vmatpush1.bf16.msra.mxu0 %v395
    %417 = vmatprep.subr.bf16.mxu0 0
    %418 = vmatpush1.bf16.msra.mxu0 %v396
    %419 = vmatprep.subr.bf16.mxu0 0
    %420 = vmatpush1.bf16.msra.mxu0 %v397
    %421 = vmatprep.subr.bf16.mxu0 0
    %422 = vmatpush1.bf16.msra.mxu0 %v398
    %423 = vmatprep.subr.bf16.mxu0 0
    %424 = vmatpush1.bf16.msra.mxu0 0
    %425 = vmatprep.subr.bf16.mxu0 0
    %426 = vmatpush1.bf16.msra.mxu0 0
    %427 = vmatprep.subr.bf16.mxu0 0
    %428 = vmatpush1.bf16.msra.mxu0 0
    %429 = vmatprep.subr.bf16.mxu0 0
    %430 = vmatpush1.bf16.msra.mxu0 0
    %431 = vmatprep.subr.bf16.mxu0 0
    %432 = vmatpush1.bf16.msra.mxu0 0
    %433 = vmatprep.subr.bf16.mxu0 0
    %434 = vmatpush1.bf16.msra.mxu0 0
    %435 = vmatprep.subr.bf16.mxu0 0
    %436 = vmatpush1.bf16.msra.mxu0 0
    %437 = vmatprep.subr.bf16.mxu0 0
    %438 = vmatpush1.bf16.msra.mxu0 0
    %439 = vmatprep.mubr.bf16.mxu0 0
    %440 = vmatmul.mubr.bf16.gmra.mrb[0].mxu0 %v349
    %v441 = vpop.f32.mrb[0].mxu0
    %v442 = vadd.f32 %v357, %v441
    %v443 = vpop.f32.mrb[0].mxu0
    %v444 = vpop.f32.mrb[0].mxu0
    %v445 = vadd.f32 %v357, %v444
    %v446 = vpop.f32.mrb[0].mxu0
    %447 = vmatprep.mubr.bf16.mxu0 0
    %448 = vmatmul.mubr.bf16.gmra.mrb[0].mxu0 %v350
    %v449 = vpop.f32.mrb[0].mxu0
    %v450 = vadd.f32 %v357, %v449
    %v451 = vpop.f32.mrb[0].mxu0
    %v452 = vpop.f32.mrb[0].mxu0
    %v453 = vadd.f32 %v357, %v452
    %v454 = vpop.f32.mrb[0].mxu0
    %455 = vmatprep.mubr.bf16.mxu0 0
    %456 = vmatmul.mubr.bf16.gmra.mrb[0].mxu0 %v351
    %v457 = vpop.f32.mrb[0].mxu0
    %v458 = vadd.f32 %v357, %v457
    %v459 = vpop.f32.mrb[0].mxu0
    %v460 = vpop.f32.mrb[0].mxu0
    %v461 = vadd.f32 %v357, %v460
    %v462 = vpop.f32.mrb[0].mxu0
    %463 = vmatprep.mubr.bf16.mxu0 0
    %464 = vmatmul.mubr.bf16.gmra.mrb[0].mxu0 %v352
    %v465 = vpop.f32.mrb[0].mxu0
    %v466 = vadd.f32 %v357, %v465
    %v467 = vpop.f32.mrb[0].mxu0
    %v468 = vpop.f32.mrb[0].mxu0
    %v469 = vadd.f32 %v357, %v468
    %v470 = vpop.f32.mrb[0].mxu0
    %471 = vdwg.mxu0
    %472 = vst [vmem:[#allocation2] sm:$0xff] %v442
    %473 = vst [vmem:[#allocation2 + $0x8] sm:$0xff] %v445
    %474 = vst [vmem:[#allocation2 + $0x10] sm:$0xff] %v450
    %475 = vst [vmem:[#allocation2 + $0x18] sm:$0xff] %v453
    %476 = vst [vmem:[#allocation2 + $0x20] sm:$0xff] %v458
    %477 = vst [vmem:[#allocation2 + $0x28] sm:$0xff] %v461
    %478 = vst [vmem:[#allocation2 + $0x30] sm:$0xff] %v466
    %479 = vst [vmem:[#allocation2 + $0x38] sm:$0xff] %v469
    // Predicated region
    $region30: #{_fwd.1} parent=1 // pred_check
      _
    $region31: #{_fwd.1} parent=1 // pred_check_branch
      %481 = sbr.rel (0) target = $region33
    $region32: #{_fwd.1} parent=1 // pred_region
      %s483 = ssub.s32 1024, 1024
      %484 = vsyncadd [#allocation3], %s483
      %s485 = sshll.u32 [#allocation2], 4
      %s486 = int_to_ptr.vmem [resolvable:$true] %s485
      %491 = dma.vmem_to_hbm [thread:$0]  %s486, 1024, %s7, [#allocation3], 128, 128, 8
    $region33: #{_fwd.1} parent=1 // pred_fallthru
      _
    // Predicated region
    $region34: #{_fwd.1} parent=1 // pred_check
      _
    $region35: #{_fwd.1} parent=1 // pred_check_branch
      %493 = sbr.rel (0) target = $region37
    $region36: #{_fwd.1} parent=1 // pred_region
      %494 = dma.done [#allocation3], 1024
    $region37: #{_fwd.1} parent=1 // pred_fallthru
      _
    %495 = vsyncpa [#allocation3], 1

</llo_original>
